<compile_context>
chip_gen: v6e
topology: v6e:2x2x1
jax: 0.10.0
libtpu: 0.0.40
codegen_flags: <defaults>
</compile_context>

<pallas_src>
import jax
import jax.numpy as jnp
from jax.experimental import pallas as pl
from jax.experimental.pallas import tpu as pltpu

LANE = 128


def _round_up(n, m):
    return (n + m - 1) // m * m


def _posenet_kernel(x_ref, w1_ref, b1_ref, w2_ref, b2_ref, o_ref):
    # fc1: cast x to bf16 in-kernel (VPU, hidden under MXU), f32 accumulation.
    x = x_ref[...].astype(w1_ref.dtype)
    h = jnp.dot(x, w1_ref[...], preferred_element_type=jnp.float32)
    h = jnp.maximum(h + b1_ref[...], 0.0)            # bias + ReLU in f32 (VPU)
    # fc2: bf16 inputs, f32 accumulation, f32 bias epilogue.
    y = jnp.dot(h.astype(w2_ref.dtype), w2_ref[...],
                preferred_element_type=jnp.float32)
    o_ref[...] = (y + b2_ref[...]).astype(o_ref.dtype)


def prepare_params(w1, b1, w2, b2):
    """One-time parameter prep (call at init, NOT per forward).

    Weights are stored (in, out) so the kernel computes y = x @ W + b, which
    equals PyTorch's x @ W_pt.T + b.  out_features is zero-padded to a
    lane-dense multiple of 128; weights are cast to bf16 (MXU-native), biases
    stay f32 for the f32 VPU epilogue.
    """
    hidden = w1.shape[1]
    out_features = w2.shape[1]
    out_pad = _round_up(out_features, LANE)

    w1_p = w1.astype(jnp.bfloat16)
    w2_p = jnp.pad(w2, ((0, 0), (0, out_pad - out_features))).astype(jnp.bfloat16)
    b1_p = b1.reshape(1, hidden).astype(jnp.float32)
    b2_p = jnp.pad(b2, (0, out_pad - out_features)).reshape(1, out_pad)
    b2_p = b2_p.astype(jnp.float32)
    return w1_p, b1_p, w2_p, b2_p


def simple_pose_net_forward(x, w1_p, b1_p, w2_p, b2_p, num_joints, output_dim,
                            *, batch_tile=1024, out_dtype=jnp.float32):
    """x: (B, F, J, D) float32.  w1_p/b1_p/w2_p/b2_p: from prepare_params().

    Returns (B, 1, num_joints, output_dim) in out_dtype (default f32).
    """
    B = x.shape[0]
    in_features = x.shape[1] * x.shape[2] * x.shape[3]
    hidden = w1_p.shape[1]
    out_pad = w2_p.shape[1]
    out_features = num_joints * output_dim
    assert w1_p.shape[0] == in_features and b2_p.shape[1] == out_pad

    # Batch tiling.  If the whole batch fits one tile, block == full array
    # (always a legal block shape) -> zero batch padding.  Otherwise pad B to
    # a multiple of an 8-row-aligned tile.
    if B <= batch_tile:
        TB, B_pad = B, B
    else:
        TB = _round_up(batch_tile, 8)
        B_pad = _round_up(B, TB)
    num_tiles = B_pad // TB

    # Glue: flatten only (no cast, no K pad); pad batch rows only if needed.
    x_flat = x.reshape(B, in_features).astype(jnp.float32)
    if B_pad != B:
        x_flat = jnp.pad(x_flat, ((0, B_pad - B), (0, 0)))

    # Megacore split only when there are multiple tiles and enough rows that
    # duplicating the resident weight fetch per core is amortized by compute.
    parallel = (num_tiles > 1) and (B_pad >= 2048)
    semantics = ("parallel",) if parallel else ("arbitrary",)

    flops = 2 * B_pad * (in_features * hidden + hidden * out_pad)
    bytes_accessed = (x_flat.size * 4 + w1_p.size * 2 + w2_p.size * 2
                      + b1_p.size * 4 + b2_p.size * 4 + B_pad * out_pad * 4)

    resident = dict(pipeline_mode=pl.Buffered(1))  # constant-index blocks

    out_flat = pl.pallas_call(
        _posenet_kernel,
        out_shape=jax.ShapeDtypeStruct((B_pad, out_pad), out_dtype),
        grid=(num_tiles,),
        in_specs=[
            pl.BlockSpec((TB, in_features), lambda i: (i, 0)),       # x: tiled
            pl.BlockSpec((in_features, hidden), lambda i: (0, 0), **resident),
            pl.BlockSpec((1, hidden), lambda i: (0, 0), **resident),
            pl.BlockSpec((hidden, out_pad), lambda i: (0, 0), **resident),
            pl.BlockSpec((1, out_pad), lambda i: (0, 0), **resident),
        ],
        out_specs=pl.BlockSpec((TB, out_pad), lambda i: (i, 0)),
        compiler_params=pltpu.CompilerParams(
            dimension_semantics=semantics,
            vmem_limit_bytes=32 * 1024 * 1024),
        cost_estimate=pl.CostEstimate(
            flops=flops, transcendentals=0, bytes_accessed=bytes_accessed),
    )(x_flat, w1_p, b1_p, w2_p, b2_p)

    # Glue: strip padding, then view(-1, 1, num_joints, output_dim).
    out = out_flat[:B, :out_features]
    return out.reshape(B, 1, num_joints, output_dim)


if __name__ == "__main__":
    # Small shapes consistent with the module.
    num_joints = 8
    num_frames = 4
    input_dim = 2
    output_dim = 3
    batch = 2

    in_features = num_frames * num_joints * input_dim   # 64
    hidden = 1024
    out_features = num_joints * output_dim               # 24

    key = jax.random.PRNGKey(0)
    kx, kw1, kb1, kw2, kb2 = jax.random.split(key, 5)

    x = jax.random.normal(kx, (batch, num_frames, num_joints, input_dim),
                          dtype=jnp.float32)
    # Deterministic synthetic parameters, stored (in, out).
    w1 = jax.random.normal(kw1, (in_features, hidden), dtype=jnp.float32) * 0.02
    b1 = jax.random.normal(kb1, (hidden,), dtype=jnp.float32) * 0.02
    w2 = jax.random.normal(kw2, (hidden, out_features), dtype=jnp.float32) * 0.02
    b2 = jax.random.normal(kb2, (out_features,), dtype=jnp.float32) * 0.02

    # One-time parameter prep (hoisted out of the forward path).
    w1_p, b1_p, w2_p, b2_p = prepare_params(w1, b1, w2, b2)
    w1_p, b1_p, w2_p, b2_p = jax.block_until_ready((w1_p, b1_p, w2_p, b2_p))

    out = simple_pose_net_forward(x, w1_p, b1_p, w2_p, b2_p,
                                  num_joints, output_dim)
    jax.block_until_ready(out)

    # Reference check in plain JAX f32 (same math as the PyTorch module).
    # Tolerance accounts for bf16 weights/activations with f32 accumulation.
    x_flat = x.reshape(batch, -1)
    ref = jnp.maximum(x_flat @ w1 + b1, 0.0) @ w2 + b2
    ref = ref.reshape(batch, 1, num_joints, output_dim)
    assert out.shape == (batch, 1, num_joints, output_dim)
    assert jnp.allclose(out, ref, atol=2e-2, rtol=2e-2), "mismatch vs reference"

    print("KERNEL_OK")
</pallas_src>

<mosaic_0001>
module attributes {stable_mosaic.version = 11 : i64} {
  func.func @_posenet_kernel(%arg0: i32, %arg1: memref<2x64xf32, #tpu.memory_space<vmem>>, %arg2: memref<64x1024xbf16, #tpu.memory_space<vmem>>, %arg3: memref<1x1024xf32, #tpu.memory_space<vmem>>, %arg4: memref<1024x128xbf16, #tpu.memory_space<vmem>>, %arg5: memref<1x128xf32, #tpu.memory_space<vmem>>, %arg6: memref<2x128xf32, #tpu.memory_space<vmem>>) attributes {dimension_semantics = [#tpu.dimension_semantics<arbitrary>], iteration_bounds = array<i64: 1>, scalar_prefetch = 0 : i64, scratch_operands = 0 : i64, tpu.core_type = #tpu.core_type<tc>, window_params = [{transform_indices = @transform_0, window_bounds = array<i64: 2, 64>}, {pipeline_mode = #tpu.pipeline_mode<synchronous>, transform_indices = @transform_1, window_bounds = array<i64: 64, 1024>}, {pipeline_mode = #tpu.pipeline_mode<synchronous>, transform_indices = @transform_2, window_bounds = array<i64: 1, 1024>}, {pipeline_mode = #tpu.pipeline_mode<synchronous>, transform_indices = @transform_3, window_bounds = array<i64: 1024, 128>}, {pipeline_mode = #tpu.pipeline_mode<synchronous>, transform_indices = @transform_4, window_bounds = array<i64: 1, 128>}, {transform_indices = @transform_5, window_bounds = array<i64: 2, 128>}]} {
    %c0 = arith.constant 0 : index
    %c0_0 = arith.constant 0 : index
    %0 = vector.load %arg1[%c0, %c0_0] : memref<2x64xf32, #tpu.memory_space<vmem>>, vector<2x64xf32>
    %1 = arith.truncf %0 : vector<2x64xf32> to vector<2x64xbf16>
    %c0_1 = arith.constant 0 : index
    %c0_2 = arith.constant 0 : index
    %2 = vector.load %arg2[%c0_1, %c0_2] : memref<64x1024xbf16, #tpu.memory_space<vmem>>, vector<64x1024xbf16>
    %cst = arith.constant dense<0.000000e+00> : vector<2x1024xf32>
    %3 = tpu.matmul %1, %2, %cst {dimension_numbers = #tpu.dot_dimension_numbers<[1], [0], [0], [1], [0, 0, 1, 1], [], []>} : vector<2x64xbf16>, vector<64x1024xbf16>, vector<2x1024xf32> -> vector<2x1024xf32>
    %c0_3 = arith.constant 0 : index
    %c0_4 = arith.constant 0 : index
    %4 = vector.load %arg3[%c0_3, %c0_4] : memref<1x1024xf32, #tpu.memory_space<vmem>>, vector<1x1024xf32>
    %5 = vector.broadcast %4 : vector<1x1024xf32> to vector<2x1024xf32>
    %6 = arith.addf %3, %5 : vector<2x1024xf32>
    %cst_5 = arith.constant 0.000000e+00 : f32
    %7 = vector.broadcast %cst_5 : f32 to vector<2x1024xf32>
    %8 = arith.maximumf %6, %7 : vector<2x1024xf32>
    %9 = arith.truncf %8 : vector<2x1024xf32> to vector<2x1024xbf16>
    %c0_6 = arith.constant 0 : index
    %c0_7 = arith.constant 0 : index
    %10 = vector.load %arg4[%c0_6, %c0_7] : memref<1024x128xbf16, #tpu.memory_space<vmem>>, vector<1024x128xbf16>
    %cst_8 = arith.constant dense<0.000000e+00> : vector<2x128xf32>
    %11 = tpu.matmul %9, %10, %cst_8 {dimension_numbers = #tpu.dot_dimension_numbers<[1], [0], [0], [1], [0, 0, 1, 1], [], []>} : vector<2x1024xbf16>, vector<1024x128xbf16>, vector<2x128xf32> -> vector<2x128xf32>
    %c0_9 = arith.constant 0 : index
    %c0_10 = arith.constant 0 : index
    %12 = vector.load %arg5[%c0_9, %c0_10] : memref<1x128xf32, #tpu.memory_space<vmem>>, vector<1x128xf32>
    %13 = vector.broadcast %12 : vector<1x128xf32> to vector<2x128xf32>
    %14 = arith.addf %11, %13 : vector<2x128xf32>
    %c0_11 = arith.constant 0 : index
    %c0_12 = arith.constant 0 : index
    %15 = vector.load %arg6[%c0_11, %c0_12] : memref<2x128xf32, #tpu.memory_space<vmem>>, vector<2x128xf32>
    tpu.vector_store %arg6[%c0_11, %c0_12], %14 {strides = array<i32>} : memref<2x128xf32, #tpu.memory_space<vmem>>, vector<2x128xf32>,
    return
  }
  func.func @transform_0(%arg0: i32) -> (i32, i32) {
    %c0_i32 = arith.constant 0 : i32
    %c0_i32_0 = arith.constant 0 : i32
    return %arg0, %c0_i32 : i32, i32
  }
  func.func @transform_1(%arg0: i32) -> (i32, i32) {
    %c0_i32 = arith.constant 0 : i32
    %c0_i32_0 = arith.constant 0 : i32
    %c0_i32_1 = arith.constant 0 : i32
    return %c0_i32, %c0_i32_0 : i32, i32
  }
  func.func @transform_2(%arg0: i32) -> (i32, i32) {
    %c0_i32 = arith.constant 0 : i32
    %c0_i32_0 = arith.constant 0 : i32
    %c0_i32_1 = arith.constant 0 : i32
    return %c0_i32, %c0_i32_0 : i32, i32
  }
  func.func @transform_3(%arg0: i32) -> (i32, i32) {
    %c0_i32 = arith.constant 0 : i32
    %c0_i32_0 = arith.constant 0 : i32
    %c0_i32_1 = arith.constant 0 : i32
    return %c0_i32, %c0_i32_0 : i32, i32
  }
  func.func @transform_4(%arg0: i32) -> (i32, i32) {
    %c0_i32 = arith.constant 0 : i32
    %c0_i32_0 = arith.constant 0 : i32
    %c0_i32_1 = arith.constant 0 : i32
    return %c0_i32, %c0_i32_0 : i32, i32
  }
  func.func @transform_5(%arg0: i32) -> (i32, i32) {
    %c0_i32 = arith.constant 0 : i32
    %c0_i32_0 = arith.constant 0 : i32
    return %arg0, %c0_i32 : i32, i32
  }
}

</mosaic_0001>

<llo_original>
// kernel: tpu_custom_call.1
$region0: #{tpu_custom_call.1}
  #allocation0 [shape = 'u32[]', space=smem, size = 0x4, offset = 0x4, fixed_abs, tag = 'smem constant byte address 0x4 - core index']
  #allocation1 [shape = 'u32[144,128]{1,0:T(1,128)}', space=vmem, size = 0x12000, scoped, tag = 'internal scratch']
  %s0 = inlined_call_operand.hbm [shape: f32[2,64], index: 0, kind: input, shape index: {}]
  %s1 = inlined_call_operand.hbm [shape: bf16[64,1024], index: 1, kind: input, shape index: {}]
  %s2 = inlined_call_operand.hbm [shape: f32[1,1024], index: 2, kind: input, shape index: {}]
  %s3 = inlined_call_operand.hbm [shape: bf16[1024,128], index: 3, kind: input, shape index: {}]
  %s4 = inlined_call_operand.vmem [shape: f32[1,128], index: 4, kind: input, shape index: {}]
  %s5 = inlined_call_operand.hbm [shape: f32[2,128], index: 5, kind: output, shape index: {}]
  %s6 = sld [smem:[#allocation0]]
  $region46: #{tpu_custom_call.1} parent=0
    _
  %s8 = ssub.s32 1, %s6
  %s9 = scalar_select 0, %s8, %s6
  $region1: #{tpu_custom_call.1} parent=0
    #allocation2 [shape = 'u8[1024]{0}', space=vmem, size = 0x400, scoped, tag = 'input window, operand 0, single buffered']
    #allocation3 [shape = 's32[1]{0}', space=sflag, size = 0x4, scoped, tag = 'scoped memory for tpu_custom_call.1']
    #allocation4 [shape = 's32[1]{0}', space=sflag, size = 0x4, scoped, tag = 'scoped memory for tpu_custom_call.1']
    #allocation5 [shape = 'u8[131072]{0}', space=vmem, size = 0x20000, scoped, tag = 'input window, operand 1, single buffered']
    #allocation6 [shape = 's32[1]{0}', space=sflag, size = 0x4, scoped, tag = 'scoped memory for tpu_custom_call.1']
    #allocation7 [shape = 'u8[4096]{0}', space=vmem, size = 0x1000, scoped, tag = 'input window, operand 2, single buffered']
    #allocation8 [shape = 'u8[262144]{0}', space=vmem, size = 0x40000, scoped, tag = 'input window, operand 3, single buffered']
    #allocation9 [shape = 's32[1]{0}', space=sflag, size = 0x4, scoped, tag = 'scoped memory for tpu_custom_call.1']
    #allocation10 [shape = 'u8[1024]{0}', space=vmem, size = 0x400, scoped, tag = 'output window, operand 0, single buffered']
    %10 = vsyncpa [#allocation3], 0
    %11 = vsyncpa [#allocation6], 0
    %12 = vsyncpa [#allocation9], 0
    %13 = vsyncpa [#allocation4], 0
    // Predicated region
    $region2: #{tpu_custom_call.1} parent=1 // pred_check
      _
    $region3: #{tpu_custom_call.1} parent=1 // pred_check_branch
      %15 = sbr.rel (0) target = $region5
    $region4: #{tpu_custom_call.1} parent=1 // pred_region
      %s17 = ssub.s32 32, 32
      %18 = vsyncadd [#allocation3], %s17
      %s20 = sshll.u32 [#allocation2], 4
      %s21 = int_to_ptr.vmem [resolvable:$true] %s20
      %23 = dma.hbm_to_vmem [thread:$0]  %s0, 32, %s21, [#allocation3]
    $region5: #{tpu_custom_call.1} parent=1 // pred_fallthru
      _
    // Predicated region
    $region6: #{tpu_custom_call.1} parent=1 // pred_check
      _
    $region7: #{tpu_custom_call.1} parent=1 // pred_check_branch
      %25 = sbr.rel (0) target = $region9
    $region8: #{tpu_custom_call.1} parent=1 // pred_region
      %s27 = ssub.s32 4096, 4096
      %28 = vsyncadd [#allocation6], %s27
      %s29 = sshll.u32 [#allocation5], 4
      %s30 = int_to_ptr.vmem [resolvable:$true] %s29
      %35 = dma.hbm_to_vmem [thread:$0]  %s1, 4096, %s30, [#allocation6], 512, 512, 32
    $region9: #{tpu_custom_call.1} parent=1 // pred_fallthru
      _
    // Predicated region
    $region10: #{tpu_custom_call.1} parent=1 // pred_check
      _
    $region11: #{tpu_custom_call.1} parent=1 // pred_check_branch
      %37 = sbr.rel (0) target = $region13
    $region12: #{tpu_custom_call.1} parent=1 // pred_region
      %s39 = ssub.s32 128, 128
      %40 = vsyncadd [#allocation6], %s39
      %s42 = sshll.u32 [#allocation7], 4
      %s43 = int_to_ptr.vmem [resolvable:$true] %s42
      %45 = dma.hbm_to_vmem [thread:$0]  %s2, 128, %s43, [#allocation6]
    $region13: #{tpu_custom_call.1} parent=1 // pred_fallthru
      _
    // Predicated region
    $region14: #{tpu_custom_call.1} parent=1 // pred_check
      _
    $region15: #{tpu_custom_call.1} parent=1 // pred_check_branch
      %47 = sbr.rel (0) target = $region17
    $region16: #{tpu_custom_call.1} parent=1 // pred_region
      %s49 = ssub.s32 8192, 8192
      %50 = vsyncadd [#allocation9], %s49
      %s51 = sshll.u32 [#allocation8], 4
      %s52 = int_to_ptr.vmem [resolvable:$true] %s51
      %57 = dma.hbm_to_vmem [thread:$0]  %s3, 8192, %s52, [#allocation9], 64, 64, 4
    $region17: #{tpu_custom_call.1} parent=1 // pred_fallthru
      _
    // Predicated region
    $region18: #{tpu_custom_call.1} parent=1 // pred_check
      _
    $region19: #{tpu_custom_call.1} parent=1 // pred_check_branch
      %59 = sbr.rel (0) target = $region21
    $region20: #{tpu_custom_call.1} parent=1 // pred_region
      _
    $region21: #{tpu_custom_call.1} parent=1 // pred_fallthru
      _
    // Predicated region
    $region22: #{tpu_custom_call.1} parent=1 // pred_check
      _
    $region23: #{tpu_custom_call.1} parent=1 // pred_check_branch
      %61 = sbr.rel (0) target = $region25
    $region24: #{tpu_custom_call.1} parent=1 // pred_region
      %62 = dma.done [#allocation3], 32
    $region25: #{tpu_custom_call.1} parent=1 // pred_fallthru
      _
    // Predicated region
    $region26: #{tpu_custom_call.1} parent=1 // pred_check
      _
    $region27: #{tpu_custom_call.1} parent=1 // pred_check_branch
      %64 = sbr.rel (0) target = $region29
    $region28: #{tpu_custom_call.1} parent=1 // pred_region
      %65 = dma.done [#allocation6], 4096
    $region29: #{tpu_custom_call.1} parent=1 // pred_fallthru
      _
    // Predicated region
    $region30: #{tpu_custom_call.1} parent=1 // pred_check
      _
    $region31: #{tpu_custom_call.1} parent=1 // pred_check_branch
      %67 = sbr.rel (0) target = $region33
    $region32: #{tpu_custom_call.1} parent=1 // pred_region
      %68 = dma.done [#allocation6], 128
    $region33: #{tpu_custom_call.1} parent=1 // pred_fallthru
      _
    // Predicated region
    $region34: #{tpu_custom_call.1} parent=1 // pred_check
      _
    $region35: #{tpu_custom_call.1} parent=1 // pred_check_branch
      %70 = sbr.rel (0) target = $region37
    $region36: #{tpu_custom_call.1} parent=1 // pred_region
      %71 = dma.done [#allocation9], 8192
    $region37: #{tpu_custom_call.1} parent=1 // pred_fallthru
      _
    %v73 = vld [vmem:[#allocation2] sm:$0x3]
    %v74 = vpack.c.bf16 %v73, %v73
    %v75 = vld [vmem:[#allocation5] sm:$0xff]
    %v76 = vld [vmem:[#allocation5 + $0x8] sm:$0xff]
    %v77 = vld [vmem:[#allocation5 + $0x10] sm:$0xff]
    %v78 = vld [vmem:[#allocation5 + $0x18] sm:$0xff]
    %v79 = vld [vmem:[#allocation5 + $0x20] sm:$0xff]
    %v80 = vld [vmem:[#allocation5 + $0x28] sm:$0xff]
    %v81 = vld [vmem:[#allocation5 + $0x30] sm:$0xff]
    %v82 = vld [vmem:[#allocation5 + $0x38] sm:$0xff]
    %v83 = vld [vmem:[#allocation5 + $0x40] sm:$0xff]
    %v84 = vld [vmem:[#allocation5 + $0x48] sm:$0xff]
    %v85 = vld [vmem:[#allocation5 + $0x50] sm:$0xff]
    %v86 = vld [vmem:[#allocation5 + $0x58] sm:$0xff]
    %v87 = vld [vmem:[#allocation5 + $0x60] sm:$0xff]
    %v88 = vld [vmem:[#allocation5 + $0x68] sm:$0xff]
    %v89 = vld [vmem:[#allocation5 + $0x70] sm:$0xff]
    %v90 = vld [vmem:[#allocation5 + $0x78] sm:$0xff]
    %v91 = vld [vmem:[#allocation5 + $0x80] sm:$0xff]
    %v92 = vld [vmem:[#allocation5 + $0x88] sm:$0xff]
    %v93 = vld [vmem:[#allocation5 + $0x90] sm:$0xff]
    %v94 = vld [vmem:[#allocation5 + $0x98] sm:$0xff]
    %v95 = vld [vmem:[#allocation5 + $0xa0] sm:$0xff]
    %v96 = vld [vmem:[#allocation5 + $0xa8] sm:$0xff]
    %v97 = vld [vmem:[#allocation5 + $0xb0] sm:$0xff]
    %v98 = vld [vmem:[#allocation5 + $0xb8] sm:$0xff]
    %v99 = vld [vmem:[#allocation5 + $0xc0] sm:$0xff]
    %v100 = vld [vmem:[#allocation5 + $0xc8] sm:$0xff]
    %v101 = vld [vmem:[#allocation5 + $0xd0] sm:$0xff]
    %v102 = vld [vmem:[#allocation5 + $0xd8] sm:$0xff]
    %v103 = vld [vmem:[#allocation5 + $0xe0] sm:$0xff]
    %v104 = vld [vmem:[#allocation5 + $0xe8] sm:$0xff]
    %v105 = vld [vmem:[#allocation5 + $0xf0] sm:$0xff]
    %v106 = vld [vmem:[#allocation5 + $0xf8] sm:$0xff]
    %v107 = vld [vmem:[#allocation7] sm:$0xff]
    %v109 = vlaneseq
    %v110 = vshrl.u32 %v109, 7
    %v111 = vsub.s32 0, %v110
    %v112 = vrot.slane %v107, %v111
    %v113 = vlaneseq
    %v114 = vshrl.u32 %v113, 7
    %v115 = vsub.s32 1, %v114
    %v116 = vrot.slane %v107, %v115
    %v117 = vlaneseq
    %v118 = vshrl.u32 %v117, 7
    %v119 = vsub.s32 2, %v118
    %v120 = vrot.slane %v107, %v119
    %v121 = vlaneseq
    %v122 = vshrl.u32 %v121, 7
    %v123 = vsub.s32 3, %v122
    %v124 = vrot.slane %v107, %v123
    %v125 = vlaneseq
    %v126 = vshrl.u32 %v125, 7
    %v127 = vsub.s32 4, %v126
    %v128 = vrot.slane %v107, %v127
    %v129 = vlaneseq
    %v130 = vshrl.u32 %v129, 7
    %v131 = vsub.s32 5, %v130
    %v132 = vrot.slane %v107, %v131
    %v133 = vlaneseq
    %v134 = vshrl.u32 %v133, 7
    %v135 = vsub.s32 6, %v134
    %v136 = vrot.slane %v107, %v135
    %v137 = vlaneseq
    %v138 = vshrl.u32 %v137, 7
    %v139 = vsub.s32 7, %v138
    %v140 = vrot.slane %v107, %v139
    %v181 = vunpack.c.l.b16 %v75
    %v182 = vunpack.c.h.b16 %v75
    %v183 = vunpack.c.l.b16 %v76
    %v184 = vunpack.c.h.b16 %v76
    %v185 = vunpack.c.l.b16 %v77
    %v186 = vunpack.c.h.b16 %v77
    %v187 = vunpack.c.l.b16 %v78
    %v188 = vunpack.c.h.b16 %v78
    %v189 = vunpack.c.l.b16 %v79
    %v190 = vunpack.c.h.b16 %v79
    %v191 = vunpack.c.l.b16 %v80
    %v192 = vunpack.c.h.b16 %v80
    %v193 = vunpack.c.l.b16 %v81
    %v194 = vunpack.c.h.b16 %v81
    %v195 = vunpack.c.l.b16 %v82
    %v196 = vunpack.c.h.b16 %v82
    %v197 = vunpack.c.l.b16 %v83
    %v198 = vunpack.c.h.b16 %v83
    %v199 = vunpack.c.l.b16 %v84
    %v200 = vunpack.c.h.b16 %v84
    %v201 = vunpack.c.l.b16 %v85
    %v202 = vunpack.c.h.b16 %v85
    %v203 = vunpack.c.l.b16 %v86
    %v204 = vunpack.c.h.b16 %v86
    %v205 = vunpack.c.l.b16 %v87
    %v206 = vunpack.c.h.b16 %v87
    %v207 = vunpack.c.l.b16 %v88
    %v208 = vunpack.c.h.b16 %v88
    %v209 = vunpack.c.l.b16 %v89
    %v210 = vunpack.c.h.b16 %v89
    %v211 = vunpack.c.l.b16 %v90
    %v212 = vunpack.c.h.b16 %v90
    %v213 = vunpack.c.l.b16 %v91
    %v214 = vunpack.c.h.b16 %v91
    %v215 = vunpack.c.l.b16 %v92
    %v216 = vunpack.c.h.b16 %v92
    %v217 = vunpack.c.l.b16 %v93
    %v218 = vunpack.c.h.b16 %v93
    %v219 = vunpack.c.l.b16 %v94
    %v220 = vunpack.c.h.b16 %v94
    %v221 = vunpack.c.l.b16 %v95
    %v222 = vunpack.c.h.b16 %v95
    %v223 = vunpack.c.l.b16 %v96
    %v224 = vunpack.c.h.b16 %v96
    %v225 = vunpack.c.l.b16 %v97
    %v226 = vunpack.c.h.b16 %v97
    %v227 = vunpack.c.l.b16 %v98
    %v228 = vunpack.c.h.b16 %v98
    %v229 = vunpack.c.l.b16 %v99
    %v230 = vunpack.c.h.b16 %v99
    %v231 = vunpack.c.l.b16 %v100
    %v232 = vunpack.c.h.b16 %v100
    %v233 = vunpack.c.l.b16 %v101
    %v234 = vunpack.c.h.b16 %v101
    %v235 = vunpack.c.l.b16 %v102
    %v236 = vunpack.c.h.b16 %v102
    %v237 = vunpack.c.l.b16 %v103
    %v238 = vunpack.c.h.b16 %v103
    %v239 = vunpack.c.l.b16 %v104
    %v240 = vunpack.c.h.b16 %v104
    %v241 = vunpack.c.l.b16 %v105
    %v242 = vunpack.c.h.b16 %v105
    %v243 = vunpack.c.l.b16 %v106
    %v244 = vunpack.c.h.b16 %v106
    %v245 = vpack.c.b16 %v189, %v181
    %v246 = vpack.c.b16 %v190, %v182
    %v247 = vpack.c.b16 %v191, %v183
    %v248 = vpack.c.b16 %v192, %v184
    %v249 = vpack.c.b16 %v193, %v185
    %v250 = vpack.c.b16 %v194, %v186
    %v251 = vpack.c.b16 %v195, %v187
    %v252 = vpack.c.b16 %v196, %v188
    %v253 = vpack.c.b16 %v205, %v197
    %v254 = vpack.c.b16 %v206, %v198
    %v255 = vpack.c.b16 %v207, %v199
    %v256 = vpack.c.b16 %v208, %v200
    %v257 = vpack.c.b16 %v209, %v201
    %v258 = vpack.c.b16 %v210, %v202
    %v259 = vpack.c.b16 %v211, %v203
    %v260 = vpack.c.b16 %v212, %v204
    %v261 = vpack.c.b16 %v221, %v213
    %v262 = vpack.c.b16 %v222, %v214
    %v263 = vpack.c.b16 %v223, %v215
    %v264 = vpack.c.b16 %v224, %v216
    %v265 = vpack.c.b16 %v225, %v217
    %v266 = vpack.c.b16 %v226, %v218
    %v267 = vpack.c.b16 %v227, %v219
    %v268 = vpack.c.b16 %v228, %v220
    %v269 = vpack.c.b16 %v237, %v229
    %v270 = vpack.c.b16 %v238, %v230
    %v271 = vpack.c.b16 %v239, %v231
    %v272 = vpack.c.b16 %v240, %v232
    %v273 = vpack.c.b16 %v241, %v233
    %v274 = vpack.c.b16 %v242, %v234
    %v275 = vpack.c.b16 %v243, %v235
    %v276 = vpack.c.b16 %v244, %v236
    %vm309 = vcmask 523264
    %v311 = vsel %vm309, %v74, 0
    %313 = vmatprep.subr.bf16.mxu0 0
    %314 = vmatpush1.bf16.msra.mxu0 0
    %315 = vmatprep.subr.bf16.mxu0 0
    %316 = vmatpush1.bf16.msra.mxu0 0
    %317 = vmatprep.subr.bf16.mxu0 0
    %318 = vmatpush1.bf16.msra.mxu0 0
    %319 = vmatprep.subr.bf16.mxu0 0
    %320 = vmatpush1.bf16.msra.mxu0 0
    %321 = vmatprep.subr.bf16.mxu0 %v270
    %322 = vmatpush1.bf16.msra.mxu0 %v269
    %323 = vmatprep.subr.bf16.mxu0 %v262
    %324 = vmatpush1.bf16.msra.mxu0 %v261
    %325 = vmatprep.subr.bf16.mxu0 %v254
    %326 = vmatpush1.bf16.msra.mxu0 %v253
    %327 = vmatprep.subr.bf16.mxu0 %v246
    %328 = vmatpush1.bf16.msra.mxu0 %v245
    %329 = vmatprep.subr.bf16.mxu0 0
    %330 = vmatpush2.bf16.msra.mxu0 0
    %331 = vmatprep.subr.bf16.mxu0 0
    %332 = vmatpush2.bf16.msra.mxu0 0
    %333 = vmatprep.subr.bf16.mxu0 0
    %334 = vmatpush2.bf16.msra.mxu0 0
    %335 = vmatprep.subr.bf16.mxu0 0
    %336 = vmatpush2.bf16.msra.mxu0 0
    %337 = vmatprep.subr.bf16.mxu0 0
    %338 = vmatpush2.bf16.msra.mxu0 0
    %339 = vmatprep.subr.bf16.mxu0 0
    %340 = vmatpush2.bf16.msra.mxu0 0
    %341 = vmatprep.subr.bf16.mxu0 0
    %342 = vmatpush2.bf16.msra.mxu0 0
    %343 = vmatprep.subr.bf16.mxu0 0
    %344 = vmatpush2.bf16.msra.mxu0 0
    %345 = vmatprep.mubr.bf16.mxu0 0
    %346 = vmatmul.mubr.bf16.gmra.mxu0 %v311
    %v347 = vpop.f32.mrf.mxu0
    %v348 = vadd.f32 %v112, %v347
    %v349 = vpop.f32.mrf.mxu0
    %v350 = vadd.f32 %v116, %v349
    %v351 = vpop.f32.mrf.mxu0
    %v352 = vpop.f32.mrf.mxu0
    %353 = vdwg.mxu0
    %354 = vmatprep.subr.bf16.mxu0 0
    %355 = vmatpush1.bf16.msra.mxu0 0
    %356 = vmatprep.subr.bf16.mxu0 0
    %357 = vmatpush1.bf16.msra.mxu0 0
    %358 = vmatprep.subr.bf16.mxu0 0
    %359 = vmatpush1.bf16.msra.mxu0 0
    %360 = vmatprep.subr.bf16.mxu0 0
    %361 = vmatpush1.bf16.msra.mxu0 0
    %362 = vmatprep.subr.bf16.mxu0 %v272
    %363 = vmatpush1.bf16.msra.mxu0 %v271
    %364 = vmatprep.subr.bf16.mxu0 %v264
    %365 = vmatpush1.bf16.msra.mxu0 %v263
    %366 = vmatprep.subr.bf16.mxu0 %v256
    %367 = vmatpush1.bf16.msra.mxu0 %v255
    %368 = vmatprep.subr.bf16.mxu0 %v248
    %369 = vmatpush1.bf16.msra.mxu0 %v247
    %370 = vmatprep.subr.bf16.mxu0 0
    %371 = vmatpush2.bf16.msra.mxu0 0
    %372 = vmatprep.subr.bf16.mxu0 0
    %373 = vmatpush2.bf16.msra.mxu0 0
    %374 = vmatprep.subr.bf16.mxu0 0
    %375 = vmatpush2.bf16.msra.mxu0 0
    %376 = vmatprep.subr.bf16.mxu0 0
    %377 = vmatpush2.bf16.msra.mxu0 0
    %378 = vmatprep.subr.bf16.mxu0 0
    %379 = vmatpush2.bf16.msra.mxu0 0
    %380 = vmatprep.subr.bf16.mxu0 0
    %381 = vmatpush2.bf16.msra.mxu0 0
    %382 = vmatprep.subr.bf16.mxu0 0
    %383 = vmatpush2.bf16.msra.mxu0 0
    %384 = vmatprep.subr.bf16.mxu0 0
    %385 = vmatpush2.bf16.msra.mxu0 0
    %386 = vmatprep.mubr.bf16.mxu0 0
    %387 = vmatmul.mubr.bf16.gmra.mxu0 %v311
    %v388 = vpop.f32.mrf.mxu0
    %v389 = vadd.f32 %v120, %v388
    %v390 = vpop.f32.mrf.mxu0
    %v391 = vadd.f32 %v124, %v390
    %v392 = vpop.f32.mrf.mxu0
    %v393 = vpop.f32.mrf.mxu0
    %394 = vdwg.mxu0
    %395 = vmatprep.subr.bf16.mxu0 0
    %396 = vmatpush1.bf16.msra.mxu0 0
    %397 = vmatprep.subr.bf16.mxu0 0
    %398 = vmatpush1.bf16.msra.mxu0 0
    %399 = vmatprep.subr.bf16.mxu0 0
    %400 = vmatpush1.bf16.msra.mxu0 0
    %401 = vmatprep.subr.bf16.mxu0 0
    %402 = vmatpush1.bf16.msra.mxu0 0
    %403 = vmatprep.subr.bf16.mxu0 %v274
    %404 = vmatpush1.bf16.msra.mxu0 %v273
    %405 = vmatprep.subr.bf16.mxu0 %v266
    %406 = vmatpush1.bf16.msra.mxu0 %v265
    %407 = vmatprep.subr.bf16.mxu0 %v258
    %408 = vmatpush1.bf16.msra.mxu0 %v257
    %409 = vmatprep.subr.bf16.mxu0 %v250
    %410 = vmatpush1.bf16.msra.mxu0 %v249
    %411 = vmatprep.subr.bf16.mxu0 0
    %412 = vmatpush2.bf16.msra.mxu0 0
    %413 = vmatprep.subr.bf16.mxu0 0
    %414 = vmatpush2.bf16.msra.mxu0 0
    %415 = vmatprep.subr.bf16.mxu0 0
    %416 = vmatpush2.bf16.msra.mxu0 0
    %417 = vmatprep.subr.bf16.mxu0 0
    %418 = vmatpush2.bf16.msra.mxu0 0
    %419 = vmatprep.subr.bf16.mxu0 0
    %420 = vmatpush2.bf16.msra.mxu0 0
    %421 = vmatprep.subr.bf16.mxu0 0
    %422 = vmatpush2.bf16.msra.mxu0 0
    %423 = vmatprep.subr.bf16.mxu0 0
    %424 = vmatpush2.bf16.msra.mxu0 0
    %425 = vmatprep.subr.bf16.mxu0 0
    %426 = vmatpush2.bf16.msra.mxu0 0
    %427 = vmatprep.mubr.bf16.mxu0 0
    %428 = vmatmul.mubr.bf16.gmra.mxu0 %v311
    %v429 = vpop.f32.mrf.mxu0
    %v430 = vadd.f32 %v128, %v429
    %v431 = vpop.f32.mrf.mxu0
    %v432 = vadd.f32 %v132, %v431
    %v433 = vpop.f32.mrf.mxu0
    %v434 = vpop.f32.mrf.mxu0
    %435 = vdwg.mxu0
    %436 = vmatprep.subr.bf16.mxu0 0
    %437 = vmatpush1.bf16.msra.mxu0 0
    %438 = vmatprep.subr.bf16.mxu0 0
    %439 = vmatpush1.bf16.msra.mxu0 0
    %440 = vmatprep.subr.bf16.mxu0 0
    %441 = vmatpush1.bf16.msra.mxu0 0
    %442 = vmatprep.subr.bf16.mxu0 0
    %443 = vmatpush1.bf16.msra.mxu0 0
    %444 = vmatprep.subr.bf16.mxu0 %v276
    %445 = vmatpush1.bf16.msra.mxu0 %v275
    %446 = vmatprep.subr.bf16.mxu0 %v268
    %447 = vmatpush1.bf16.msra.mxu0 %v267
    %448 = vmatprep.subr.bf16.mxu0 %v260
    %449 = vmatpush1.bf16.msra.mxu0 %v259
    %450 = vmatprep.subr.bf16.mxu0 %v252
    %451 = vmatpush1.bf16.msra.mxu0 %v251
    %452 = vmatprep.subr.bf16.mxu0 0
    %453 = vmatpush2.bf16.msra.mxu0 0
    %454 = vmatprep.subr.bf16.mxu0 0
    %455 = vmatpush2.bf16.msra.mxu0 0
    %456 = vmatprep.subr.bf16.mxu0 0
    %457 = vmatpush2.bf16.msra.mxu0 0
    %458 = vmatprep.subr.bf16.mxu0 0
    %459 = vmatpush2.bf16.msra.mxu0 0
    %460 = vmatprep.subr.bf16.mxu0 0
    %461 = vmatpush2.bf16.msra.mxu0 0
    %462 = vmatprep.subr.bf16.mxu0 0
    %463 = vmatpush2.bf16.msra.mxu0 0
    %464 = vmatprep.subr.bf16.mxu0 0
    %465 = vmatpush2.bf16.msra.mxu0 0
    %466 = vmatprep.subr.bf16.mxu0 0
    %467 = vmatpush2.bf16.msra.mxu0 0
    %468 = vmatprep.mubr.bf16.mxu0 0
    %469 = vmatmul.mubr.bf16.gmra.mxu0 %v311
    %v470 = vpop.f32.mrf.mxu0
    %v471 = vadd.f32 %v136, %v470
    %v472 = vpop.f32.mrf.mxu0
    %v473 = vadd.f32 %v140, %v472
    %v474 = vpop.f32.mrf.mxu0
    %v475 = vpop.f32.mrf.mxu0
    %476 = vdwg.mxu0
    %v477 = vmax.f32 %v348, 0.0
    %v478 = vmax.f32 %v350, 0.0
    %v479 = vmax.f32 %v389, 0.0
    %v480 = vmax.f32 %v391, 0.0
    %v481 = vmax.f32 %v430, 0.0
    %v482 = vmax.f32 %v432, 0.0
    %v483 = vmax.f32 %v471, 0.0
    %v484 = vmax.f32 %v473, 0.0
    %v485 = vpack.c.bf16 %v477, %v477
    %v486 = vpack.c.bf16 %v478, %v478
    %v487 = vpack.c.bf16 %v479, %v479
    %v488 = vpack.c.bf16 %v480, %v480
    %v489 = vpack.c.bf16 %v481, %v481
    %v490 = vpack.c.bf16 %v482, %v482
    %v491 = vpack.c.bf16 %v483, %v483
    %v492 = vpack.c.bf16 %v484, %v484
    %v493 = vld [vmem:[#allocation8] sm:$0xf]
    %v494 = vld [vmem:[#allocation8 + $0x4] sm:$0xf]
    %v495 = vld [vmem:[#allocation8 + $0x8] sm:$0xf]
    %v496 = vld [vmem:[#allocation8 + $0xc] sm:$0xf]
    %v497 = vld [vmem:[#allocation8 + $0x10] sm:$0xf]
    %v498 = vld [vmem:[#allocation8 + $0x14] sm:$0xf]
    %v499 = vld [vmem:[#allocation8 + $0x18] sm:$0xf]
    %v500 = vld [vmem:[#allocation8 + $0x1c] sm:$0xf]
    %v501 = vld [vmem:[#allocation8 + $0x20] sm:$0xf]
    %v502 = vld [vmem:[#allocation8 + $0x24] sm:$0xf]
    %v503 = vld [vmem:[#allocation8 + $0x28] sm:$0xf]
    %v504 = vld [vmem:[#allocation8 + $0x2c] sm:$0xf]
    %v505 = vld [vmem:[#allocation8 + $0x30] sm:$0xf]
    %v506 = vld [vmem:[#allocation8 + $0x34] sm:$0xf]
    %v507 = vld [vmem:[#allocation8 + $0x38] sm:$0xf]
    %v508 = vld [vmem:[#allocation8 + $0x3c] sm:$0xf]
    %v509 = vld [vmem:[#allocation8 + $0x40] sm:$0xf]
    %v510 = vld [vmem:[#allocation8 + $0x44] sm:$0xf]
    %v511 = vld [vmem:[#allocation8 + $0x48] sm:$0xf]
    %v512 = vld [vmem:[#allocation8 + $0x4c] sm:$0xf]
    %v513 = vld [vmem:[#allocation8 + $0x50] sm:$0xf]
    %v514 = vld [vmem:[#allocation8 + $0x54] sm:$0xf]
    %v515 = vld [vmem:[#allocation8 + $0x58] sm:$0xf]
    %v516 = vld [vmem:[#allocation8 + $0x5c] sm:$0xf]
    %v517 = vld [vmem:[#allocation8 + $0x60] sm:$0xf]
    %v518 = vld [vmem:[#allocation8 + $0x64] sm:$0xf]
    %v519 = vld [vmem:[#allocation8 + $0x68] sm:$0xf]
    %v520 = vld [vmem:[#allocation8 + $0x6c] sm:$0xf]
    %v521 = vld [vmem:[#allocation8 + $0x70] sm:$0xf]
    %v522 = vld [vmem:[#allocation8 + $0x74] sm:$0xf]
    %v523 = vld [vmem:[#allocation8 + $0x78] sm:$0xf]
    %v524 = vld [vmem:[#allocation8 + $0x7c] sm:$0xf]
    %v525 = vld [vmem:[#allocation8 + $0x80] sm:$0xf]
    %v526 = vld [vmem:[#allocation8 + $0x84] sm:$0xf]
    %v527 = vld [vmem:[#allocation8 + $0x88] sm:$0xf]
    %v528 = vld [vmem:[#allocation8 + $0x8c] sm:$0xf]
    %v529 = vld [vmem:[#allocation8 + $0x90] sm:$0xf]
    %v530 = vld [vmem:[#allocation8 + $0x94] sm:$0xf]
    %v531 = vld [vmem:[#allocation8 + $0x98] sm:$0xf]
    %v532 = vld [vmem:[#allocation8 + $0x9c] sm:$0xf]
    %v533 = vld [vmem:[#allocation8 + $0xa0] sm:$0xf]
    %v534 = vld [vmem:[#allocation8 + $0xa4] sm:$0xf]
    %v535 = vld [vmem:[#allocation8 + $0xa8] sm:$0xf]
    %v536 = vld [vmem:[#allocation8 + $0xac] sm:$0xf]
    %v537 = vld [vmem:[#allocation8 + $0xb0] sm:$0xf]
    %v538 = vld [vmem:[#allocation8 + $0xb4] sm:$0xf]
    %v539 = vld [vmem:[#allocation8 + $0xb8] sm:$0xf]
    %v540 = vld [vmem:[#allocation8 + $0xbc] sm:$0xf]
    %v541 = vld [vmem:[#allocation8 + $0xc0] sm:$0xf]
    %v542 = vld [vmem:[#allocation8 + $0xc4] sm:$0xf]
    %v543 = vld [vmem:[#allocation8 + $0xc8] sm:$0xf]
    %v544 = vld [vmem:[#allocation8 + $0xcc] sm:$0xf]
    %v545 = vld [vmem:[#allocation8 + $0xd0] sm:$0xf]
    %v546 = vld [vmem:[#allocation8 + $0xd4] sm:$0xf]
    %v547 = vld [vmem:[#allocation8 + $0xd8] sm:$0xf]
    %v548 = vld [vmem:[#allocation8 + $0xdc] sm:$0xf]
    %v549 = vld [vmem:[#allocation8 + $0xe0] sm:$0xf]
    %v550 = vld [vmem:[#allocation8 + $0xe4] sm:$0xf]
    %v551 = vld [vmem:[#allocation8 + $0xe8] sm:$0xf]
    %v552 = vld [vmem:[#allocation8 + $0xec] sm:$0xf]
    %v553 = vld [vmem:[#allocation8 + $0xf0] sm:$0xf]
    %v554 = vld [vmem:[#allocation8 + $0xf4] sm:$0xf]
    %v555 = vld [vmem:[#allocation8 + $0xf8] sm:$0xf]
    %v556 = vld [vmem:[#allocation8 + $0xfc] sm:$0xf]
    %v557 = vld [vmem:[#allocation8 + $0x100] sm:$0xf]
    %v558 = vld [vmem:[#allocation8 + $0x104] sm:$0xf]
    %v559 = vld [vmem:[#allocation8 + $0x108] sm:$0xf]
    %v560 = vld [vmem:[#allocation8 + $0x10c] sm:$0xf]
    %v561 = vld [vmem:[#allocation8 + $0x110] sm:$0xf]
    %v562 = vld [vmem:[#allocation8 + $0x114] sm:$0xf]
    %v563 = vld [vmem:[#allocation8 + $0x118] sm:$0xf]
    %v564 = vld [vmem:[#allocation8 + $0x11c] sm:$0xf]
    %v565 = vld [vmem:[#allocation8 + $0x120] sm:$0xf]
    %v566 = vld [vmem:[#allocation8 + $0x124] sm:$0xf]
    %v567 = vld [vmem:[#allocation8 + $0x128] sm:$0xf]
    %v568 = vld [vmem:[#allocation8 + $0x12c] sm:$0xf]
    %v569 = vld [vmem:[#allocation8 + $0x130] sm:$0xf]
    %v570 = vld [vmem:[#allocation8 + $0x134] sm:$0xf]
    %v571 = vld [vmem:[#allocation8 + $0x138] sm:$0xf]
    %v572 = vld [vmem:[#allocation8 + $0x13c] sm:$0xf]
    %v573 = vld [vmem:[#allocation8 + $0x140] sm:$0xf]
    %v574 = vld [vmem:[#allocation8 + $0x144] sm:$0xf]
    %v575 = vld [vmem:[#allocation8 + $0x148] sm:$0xf]
    %v576 = vld [vmem:[#allocation8 + $0x14c] sm:$0xf]
    %v577 = vld [vmem:[#allocation8 + $0x150] sm:$0xf]
    %v578 = vld [vmem:[#allocation8 + $0x154] sm:$0xf]
    %v579 = vld [vmem:[#allocation8 + $0x158] sm:$0xf]
    %v580 = vld [vmem:[#allocation8 + $0x15c] sm:$0xf]
    %v581 = vld [vmem:[#allocation8 + $0x160] sm:$0xf]
    %v582 = vld [vmem:[#allocation8 + $0x164] sm:$0xf]
    %v583 = vld [vmem:[#allocation8 + $0x168] sm:$0xf]
    %v584 = vld [vmem:[#allocation8 + $0x16c] sm:$0xf]
    %v585 = vld [vmem:[#allocation8 + $0x170] sm:$0xf]
    %v586 = vld [vmem:[#allocation8 + $0x174] sm:$0xf]
    %v587 = vld [vmem:[#allocation8 + $0x178] sm:$0xf]
    %v588 = vld [vmem:[#allocation8 + $0x17c] sm:$0xf]
    %v589 = vld [vmem:[#allocation8 + $0x180] sm:$0xf]
    %v590 = vld [vmem:[#allocation8 + $0x184] sm:$0xf]
    %v591 = vld [vmem:[#allocation8 + $0x188] sm:$0xf]
    %v592 = vld [vmem:[#allocation8 + $0x18c] sm:$0xf]
    %v593 = vld [vmem:[#allocation8 + $0x190] sm:$0xf]
    %v594 = vld [vmem:[#allocation8 + $0x194] sm:$0xf]
    %v595 = vld [vmem:[#allocation8 + $0x198] sm:$0xf]
    %v596 = vld [vmem:[#allocation8 + $0x19c] sm:$0xf]
    %v597 = vld [vmem:[#allocation8 + $0x1a0] sm:$0xf]
    %v598 = vld [vmem:[#allocation8 + $0x1a4] sm:$0xf]
    %v599 = vld [vmem:[#allocation8 + $0x1a8] sm:$0xf]
    %v600 = vld [vmem:[#allocation8 + $0x1ac] sm:$0xf]
    %v601 = vld [vmem:[#allocation8 + $0x1b0] sm:$0xf]
    %v602 = vld [vmem:[#allocation8 + $0x1b4] sm:$0xf]
    %v603 = vld [vmem:[#allocation8 + $0x1b8] sm:$0xf]
    %v604 = vld [vmem:[#allocation8 + $0x1bc] sm:$0xf]
    %v605 = vld [vmem:[#allocation8 + $0x1c0] sm:$0xf]
    %v606 = vld [vmem:[#allocation8 + $0x1c4] sm:$0xf]
    %v607 = vld [vmem:[#allocation8 + $0x1c8] sm:$0xf]
    %v608 = vld [vmem:[#allocation8 + $0x1cc] sm:$0xf]
    %v609 = vld [vmem:[#allocation8 + $0x1d0] sm:$0xf]
    %v610 = vld [vmem:[#allocation8 + $0x1d4] sm:$0xf]
    %v611 = vld [vmem:[#allocation8 + $0x1d8] sm:$0xf]
    %v612 = vld [vmem:[#allocation8 + $0x1dc] sm:$0xf]
    %v613 = vld [vmem:[#allocation8 + $0x1e0] sm:$0xf]
    %v614 = vld [vmem:[#allocation8 + $0x1e4] sm:$0xf]
    %v615 = vld [vmem:[#allocation8 + $0x1e8] sm:$0xf]
    %v616 = vld [vmem:[#allocation8 + $0x1ec] sm:$0xf]
    %v617 = vld [vmem:[#allocation8 + $0x1f0] sm:$0xf]
    %v618 = vld [vmem:[#allocation8 + $0x1f4] sm:$0xf]
    %v619 = vld [vmem:[#allocation8 + $0x1f8] sm:$0xf]
    %v620 = vld [vmem:[#allocation8 + $0x1fc] sm:$0xf]
    %v621 = vld [vmem:[%s4] sm:$0x1]
    %v623 = vlaneseq
    %v624 = vshrl.u32 %v623, 7
    %v625 = vsub.s32 0, %v624
    %v626 = vrot.slane %v621, %v625
    %v756 = vunpack.c.l.b16 %v493
    %v757 = vunpack.c.l.b16 %v494
    %v758 = vunpack.c.l.b16 %v495
    %v759 = vunpack.c.l.b16 %v496
    %v760 = vunpack.c.l.b16 %v497
    %v761 = vunpack.c.l.b16 %v498
    %v762 = vunpack.c.l.b16 %v499
    %v763 = vunpack.c.l.b16 %v500
    %v764 = vunpack.c.l.b16 %v501
    %v765 = vunpack.c.l.b16 %v502
    %v766 = vunpack.c.l.b16 %v503
    %v767 = vunpack.c.l.b16 %v504
    %v768 = vunpack.c.l.b16 %v505
    %v769 = vunpack.c.l.b16 %v506
    %v770 = vunpack.c.l.b16 %v507
    %v771 = vunpack.c.l.b16 %v508
    %v772 = vunpack.c.l.b16 %v509
    %v773 = vunpack.c.l.b16 %v510
    %v774 = vunpack.c.l.b16 %v511
    %v775 = vunpack.c.l.b16 %v512
    %v776 = vunpack.c.l.b16 %v513
    %v777 = vunpack.c.l.b16 %v514
    %v778 = vunpack.c.l.b16 %v515
    %v779 = vunpack.c.l.b16 %v516
    %v780 = vunpack.c.l.b16 %v517
    %v781 = vunpack.c.l.b16 %v518
    %v782 = vunpack.c.l.b16 %v519
    %v783 = vunpack.c.l.b16 %v520
    %v784 = vunpack.c.l.b16 %v521
    %v785 = vunpack.c.l.b16 %v522
    %v786 = vunpack.c.l.b16 %v523
    %v787 = vunpack.c.l.b16 %v524
    %v788 = vunpack.c.l.b16 %v525
    %v789 = vunpack.c.l.b16 %v526
    %v790 = vunpack.c.l.b16 %v527
    %v791 = vunpack.c.l.b16 %v528
    %v792 = vunpack.c.l.b16 %v529
    %v793 = vunpack.c.l.b16 %v530
    %v794 = vunpack.c.l.b16 %v531
    %v795 = vunpack.c.l.b16 %v532
    %v796 = vunpack.c.l.b16 %v533
    %v797 = vunpack.c.l.b16 %v534
    %v798 = vunpack.c.l.b16 %v535
    %v799 = vunpack.c.l.b16 %v536
    %v800 = vunpack.c.l.b16 %v537
    %v801 = vunpack.c.l.b16 %v538
    %v802 = vunpack.c.l.b16 %v539
    %v803 = vunpack.c.l.b16 %v540
    %v804 = vunpack.c.l.b16 %v541
    %v805 = vunpack.c.l.b16 %v542
    %v806 = vunpack.c.l.b16 %v543
    %v807 = vunpack.c.l.b16 %v544
    %v808 = vunpack.c.l.b16 %v545
    %v809 = vunpack.c.l.b16 %v546
    %v810 = vunpack.c.l.b16 %v547
    %v811 = vunpack.c.l.b16 %v548
    %v812 = vunpack.c.l.b16 %v549
    %v813 = vunpack.c.l.b16 %v550
    %v814 = vunpack.c.l.b16 %v551
    %v815 = vunpack.c.l.b16 %v552
    %v816 = vunpack.c.l.b16 %v553
    %v817 = vunpack.c.l.b16 %v554
    %v818 = vunpack.c.l.b16 %v555
    %v819 = vunpack.c.l.b16 %v556
    %v820 = vunpack.c.l.b16 %v557
    %v821 = vunpack.c.l.b16 %v558
    %v822 = vunpack.c.l.b16 %v559
    %v823 = vunpack.c.l.b16 %v560
    %v824 = vunpack.c.l.b16 %v561
    %v825 = vunpack.c.l.b16 %v562
    %v826 = vunpack.c.l.b16 %v563
    %v827 = vunpack.c.l.b16 %v564
    %v828 = vunpack.c.l.b16 %v565
    %v829 = vunpack.c.l.b16 %v566
    %v830 = vunpack.c.l.b16 %v567
    %v831 = vunpack.c.l.b16 %v568
    %v832 = vunpack.c.l.b16 %v569
    %v833 = vunpack.c.l.b16 %v570
    %v834 = vunpack.c.l.b16 %v571
    %v835 = vunpack.c.l.b16 %v572
    %v836 = vunpack.c.l.b16 %v573
    %v837 = vunpack.c.l.b16 %v574
    %v838 = vunpack.c.l.b16 %v575
    %v839 = vunpack.c.l.b16 %v576
    %v840 = vunpack.c.l.b16 %v577
    %v841 = vunpack.c.l.b16 %v578
    %v842 = vunpack.c.l.b16 %v579
    %v843 = vunpack.c.l.b16 %v580
    %v844 = vunpack.c.l.b16 %v581
    %v845 = vunpack.c.l.b16 %v582
    %v846 = vunpack.c.l.b16 %v583
    %v847 = vunpack.c.l.b16 %v584
    %v848 = vunpack.c.l.b16 %v585
    %v849 = vunpack.c.l.b16 %v586
    %v850 = vunpack.c.l.b16 %v587
    %v851 = vunpack.c.l.b16 %v588
    %v852 = vunpack.c.l.b16 %v589
    %v853 = vunpack.c.l.b16 %v590
    %v854 = vunpack.c.l.b16 %v591
    %v855 = vunpack.c.l.b16 %v592
    %v856 = vunpack.c.l.b16 %v593
    %v857 = vunpack.c.l.b16 %v594
    %v858 = vunpack.c.l.b16 %v595
    %v859 = vunpack.c.l.b16 %v596
    %v860 = vunpack.c.l.b16 %v597
    %v861 = vunpack.c.l.b16 %v598
    %v862 = vunpack.c.l.b16 %v599
    %v863 = vunpack.c.l.b16 %v600
    %v864 = vunpack.c.l.b16 %v601
    %v865 = vunpack.c.l.b16 %v602
    %v866 = vunpack.c.l.b16 %v603
    %v867 = vunpack.c.l.b16 %v604
    %v868 = vunpack.c.l.b16 %v605
    %v869 = vunpack.c.l.b16 %v606
    %v870 = vunpack.c.l.b16 %v607
    %v871 = vunpack.c.l.b16 %v608
    %v872 = vunpack.c.l.b16 %v609
    %v873 = vunpack.c.l.b16 %v610
    %v874 = vunpack.c.l.b16 %v611
    %v875 = vunpack.c.l.b16 %v612
    %v876 = vunpack.c.l.b16 %v613
    %v877 = vunpack.c.l.b16 %v614
    %v878 = vunpack.c.l.b16 %v615
    %v879 = vunpack.c.l.b16 %v616
    %v880 = vunpack.c.l.b16 %v617
    %v881 = vunpack.c.l.b16 %v618
    %v882 = vunpack.c.l.b16 %v619
    %v883 = vunpack.c.l.b16 %v620
    %v884 = vpack.c.b16 %v757, %v756
    %v885 = vpack.c.b16 %v759, %v758
    %v886 = vpack.c.b16 %v761, %v760
    %v887 = vpack.c.b16 %v763, %v762
    %v888 = vpack.c.b16 %v765, %v764
    %v889 = vpack.c.b16 %v767, %v766
    %v890 = vpack.c.b16 %v769, %v768
    %v891 = vpack.c.b16 %v771, %v770
    %v892 = vpack.c.b16 %v773, %v772
    %v893 = vpack.c.b16 %v775, %v774
    %v894 = vpack.c.b16 %v777, %v776
    %v895 = vpack.c.b16 %v779, %v778
    %v896 = vpack.c.b16 %v781, %v780
    %v897 = vpack.c.b16 %v783, %v782
    %v898 = vpack.c.b16 %v785, %v784
    %v899 = vpack.c.b16 %v787, %v786
    %v900 = vpack.c.b16 %v789, %v788
    %v901 = vpack.c.b16 %v791, %v790
    %v902 = vpack.c.b16 %v793, %v792
    %v903 = vpack.c.b16 %v795, %v794
    %v904 = vpack.c.b16 %v797, %v796
    %v905 = vpack.c.b16 %v799, %v798
    %v906 = vpack.c.b16 %v801, %v800
    %v907 = vpack.c.b16 %v803, %v802
    %v908 = vpack.c.b16 %v805, %v804
    %v909 = vpack.c.b16 %v807, %v806
    %v910 = vpack.c.b16 %v809, %v808
    %v911 = vpack.c.b16 %v811, %v810
    %v912 = vpack.c.b16 %v813, %v812
    %v913 = vpack.c.b16 %v815, %v814
    %v914 = vpack.c.b16 %v817, %v816
    %v915 = vpack.c.b16 %v819, %v818
    %v916 = vpack.c.b16 %v821, %v820
    %v917 = vpack.c.b16 %v823, %v822
    %v918 = vpack.c.b16 %v825, %v824
    %v919 = vpack.c.b16 %v827, %v826
    %v920 = vpack.c.b16 %v829, %v828
    %v921 = vpack.c.b16 %v831, %v830
    %v922 = vpack.c.b16 %v833, %v832
    %v923 = vpack.c.b16 %v835, %v834
    %v924 = vpack.c.b16 %v837, %v836
    %v925 = vpack.c.b16 %v839, %v838
    %v926 = vpack.c.b16 %v841, %v840
    %v927 = vpack.c.b16 %v843, %v842
    %v928 = vpack.c.b16 %v845, %v844
    %v929 = vpack.c.b16 %v847, %v846
    %v930 = vpack.c.b16 %v849, %v848
    %v931 = vpack.c.b16 %v851, %v850
    %v932 = vpack.c.b16 %v853, %v852
    %v933 = vpack.c.b16 %v855, %v854
    %v934 = vpack.c.b16 %v857, %v856
    %v935 = vpack.c.b16 %v859, %v858
    %v936 = vpack.c.b16 %v861, %v860
    %v937 = vpack.c.b16 %v863, %v862
    %v938 = vpack.c.b16 %v865, %v864
    %v939 = vpack.c.b16 %v867, %v866
    %v940 = vpack.c.b16 %v869, %v868
    %v941 = vpack.c.b16 %v871, %v870
    %v942 = vpack.c.b16 %v873, %v872
    %v943 = vpack.c.b16 %v875, %v874
    %v944 = vpack.c.b16 %v877, %v876
    %v945 = vpack.c.b16 %v879, %v878
    %v946 = vpack.c.b16 %v881, %v880
    %v947 = vpack.c.b16 %v883, %v882
    %1012 = vmatprep.subr.bf16.mxu0 0
    %1013 = vmatpush1.bf16.msra.mxu0 %v891
    %1014 = vmatprep.subr.bf16.mxu0 0
    %1015 = vmatpush1.bf16.msra.mxu0 %v890
    %1016 = vmatprep.subr.bf16.mxu0 0
    %1017 = vmatpush1.bf16.msra.mxu0 %v889
    %1018 = vmatprep.subr.bf16.mxu0 0
    %1019 = vmatpush1.bf16.msra.mxu0 %v888
    %1020 = vmatprep.subr.bf16.mxu0 0
    %1021 = vmatpush1.bf16.msra.mxu0 %v887
    %1022 = vmatprep.subr.bf16.mxu0 0
    %1023 = vmatpush1.bf16.msra.mxu0 %v886
    %1024 = vmatprep.subr.bf16.mxu0 0
    %1025 = vmatpush1.bf16.msra.mxu0 %v885
    %1026 = vmatprep.subr.bf16.mxu0 0
    %1027 = vmatpush1.bf16.msra.mxu0 %v884
    %1028 = vmatprep.subr.bf16.mxu0 0
    %1029 = vmatpush2.bf16.msra.mxu0 %v899
    %1030 = vmatprep.subr.bf16.mxu0 0
    %1031 = vmatpush2.bf16.msra.mxu0 %v898
    %1032 = vmatprep.subr.bf16.mxu0 0
    %1033 = vmatpush2.bf16.msra.mxu0 %v897
    %1034 = vmatprep.subr.bf16.mxu0 0
    %1035 = vmatpush2.bf16.msra.mxu0 %v896
    %1036 = vmatprep.subr.bf16.mxu0 0
    %1037 = vmatpush2.bf16.msra.mxu0 %v895
    %1038 = vmatprep.subr.bf16.mxu0 0
    %1039 = vmatpush2.bf16.msra.mxu0 %v894
    %1040 = vmatprep.subr.bf16.mxu0 0
    %1041 = vmatpush2.bf16.msra.mxu0 %v893
    %1042 = vmatprep.subr.bf16.mxu0 0
    %1043 = vmatpush2.bf16.msra.mxu0 %v892
    %1044 = vmatprep.mubr.bf16.mxu0 %v486
    %1045 = vmatmul.mubr.bf16.gmra.mxu0 %v485
    %v1046 = vpop.f32.mrf.mxu0
    %v1047 = vadd.f32 %v626, %v1046
    %v1048 = vpop.f32.mrf.mxu0
    %v1049 = vpop.f32.mrf.mxu0
    %v1050 = vpop.f32.mrf.mxu0
    %1051 = vdwg.mxu0
    %1052 = vmatprep.subr.bf16.mxu0 0
    %1053 = vmatpush1.bf16.msra.mxu0 %v907
    %1054 = vmatprep.subr.bf16.mxu0 0
    %1055 = vmatpush1.bf16.msra.mxu0 %v906
    %1056 = vmatprep.subr.bf16.mxu0 0
    %1057 = vmatpush1.bf16.msra.mxu0 %v905
    %1058 = vmatprep.subr.bf16.mxu0 0
    %1059 = vmatpush1.bf16.msra.mxu0 %v904
    %1060 = vmatprep.subr.bf16.mxu0 0
    %1061 = vmatpush1.bf16.msra.mxu0 %v903
    %1062 = vmatprep.subr.bf16.mxu0 0
    %1063 = vmatpush1.bf16.msra.mxu0 %v902
    %1064 = vmatprep.subr.bf16.mxu0 0
    %1065 = vmatpush1.bf16.msra.mxu0 %v901
    %1066 = vmatprep.subr.bf16.mxu0 0
    %1067 = vmatpush1.bf16.msra.mxu0 %v900
    %1068 = vmatprep.subr.bf16.mxu0 0
    %1069 = vmatpush2.bf16.msra.mxu0 %v915
    %1070 = vmatprep.subr.bf16.mxu0 0
    %1071 = vmatpush2.bf16.msra.mxu0 %v914
    %1072 = vmatprep.subr.bf16.mxu0 0
    %1073 = vmatpush2.bf16.msra.mxu0 %v913
    %1074 = vmatprep.subr.bf16.mxu0 0
    %1075 = vmatpush2.bf16.msra.mxu0 %v912
    %1076 = vmatprep.subr.bf16.mxu0 0
    %1077 = vmatpush2.bf16.msra.mxu0 %v911
    %1078 = vmatprep.subr.bf16.mxu0 0
    %1079 = vmatpush2.bf16.msra.mxu0 %v910
    %1080 = vmatprep.subr.bf16.mxu0 0
    %1081 = vmatpush2.bf16.msra.mxu0 %v909
    %1082 = vmatprep.subr.bf16.mxu0 0
    %1083 = vmatpush2.bf16.msra.mxu0 %v908
    %1084 = vmatprep.mubr.bf16.mxu0 %v488
    %1085 = vmatmul.mubr.bf16.gmra.mxu0 %v487
    %v1086 = vpop.f32.mrf.mxu0
    %v1087 = vadd.f32 %v1047, %v1086
    %v1088 = vpop.f32.mrf.mxu0
    %v1089 = vpop.f32.mrf.mxu0
    %v1090 = vpop.f32.mrf.mxu0
    %1091 = vdwg.mxu0
    %1092 = vmatprep.subr.bf16.mxu0 0
    %1093 = vmatpush1.bf16.msra.mxu0 %v923
    %1094 = vmatprep.subr.bf16.mxu0 0
    %1095 = vmatpush1.bf16.msra.mxu0 %v922
    %1096 = vmatprep.subr.bf16.mxu0 0
    %1097 = vmatpush1.bf16.msra.mxu0 %v921
    %1098 = vmatprep.subr.bf16.mxu0 0
    %1099 = vmatpush1.bf16.msra.mxu0 %v920
    %1100 = vmatprep.subr.bf16.mxu0 0
    %1101 = vmatpush1.bf16.msra.mxu0 %v919
    %1102 = vmatprep.subr.bf16.mxu0 0
    %1103 = vmatpush1.bf16.msra.mxu0 %v918
    %1104 = vmatprep.subr.bf16.mxu0 0
    %1105 = vmatpush1.bf16.msra.mxu0 %v917
    %1106 = vmatprep.subr.bf16.mxu0 0
    %1107 = vmatpush1.bf16.msra.mxu0 %v916
    %1108 = vmatprep.subr.bf16.mxu0 0
    %1109 = vmatpush2.bf16.msra.mxu0 %v931
    %1110 = vmatprep.subr.bf16.mxu0 0
    %1111 = vmatpush2.bf16.msra.mxu0 %v930
    %1112 = vmatprep.subr.bf16.mxu0 0
    %1113 = vmatpush2.bf16.msra.mxu0 %v929
    %1114 = vmatprep.subr.bf16.mxu0 0
    %1115 = vmatpush2.bf16.msra.mxu0 %v928
    %1116 = vmatprep.subr.bf16.mxu0 0
    %1117 = vmatpush2.bf16.msra.mxu0 %v927
    %1118 = vmatprep.subr.bf16.mxu0 0
    %1119 = vmatpush2.bf16.msra.mxu0 %v926
    %1120 = vmatprep.subr.bf16.mxu0 0
    %1121 = vmatpush2.bf16.msra.mxu0 %v925
    %1122 = vmatprep.subr.bf16.mxu0 0
    %1123 = vmatpush2.bf16.msra.mxu0 %v924
    %1124 = vmatprep.mubr.bf16.mxu0 %v490
    %1125 = vmatmul.mubr.bf16.gmra.mxu0 %v489
    %v1126 = vpop.f32.mrf.mxu0
    %v1127 = vadd.f32 %v1087, %v1126
    %v1128 = vpop.f32.mrf.mxu0
    %v1129 = vpop.f32.mrf.mxu0
    %v1130 = vpop.f32.mrf.mxu0
    %1131 = vdwg.mxu0
    %1132 = vmatprep.subr.bf16.mxu0 0
    %1133 = vmatpush1.bf16.msra.mxu0 %v939
    %1134 = vmatprep.subr.bf16.mxu0 0
    %1135 = vmatpush1.bf16.msra.mxu0 %v938
    %1136 = vmatprep.subr.bf16.mxu0 0
    %1137 = vmatpush1.bf16.msra.mxu0 %v937
    %1138 = vmatprep.subr.bf16.mxu0 0
    %1139 = vmatpush1.bf16.msra.mxu0 %v936
    %1140 = vmatprep.subr.bf16.mxu0 0
    %1141 = vmatpush1.bf16.msra.mxu0 %v935
    %1142 = vmatprep.subr.bf16.mxu0 0
    %1143 = vmatpush1.bf16.msra.mxu0 %v934
    %1144 = vmatprep.subr.bf16.mxu0 0
    %1145 = vmatpush1.bf16.msra.mxu0 %v933
    %1146 = vmatprep.subr.bf16.mxu0 0
    %1147 = vmatpush1.bf16.msra.mxu0 %v932
    %1148 = vmatprep.subr.bf16.mxu0 0
    %1149 = vmatpush2.bf16.msra.mxu0 %v947
    %1150 = vmatprep.subr.bf16.mxu0 0
    %1151 = vmatpush2.bf16.msra.mxu0 %v946
    %1152 = vmatprep.subr.bf16.mxu0 0
    %1153 = vmatpush2.bf16.msra.mxu0 %v945
    %1154 = vmatprep.subr.bf16.mxu0 0
    %1155 = vmatpush2.bf16.msra.mxu0 %v944
    %1156 = vmatprep.subr.bf16.mxu0 0
    %1157 = vmatpush2.bf16.msra.mxu0 %v943
    %1158 = vmatprep.subr.bf16.mxu0 0
    %1159 = vmatpush2.bf16.msra.mxu0 %v942
    %1160 = vmatprep.subr.bf16.mxu0 0
    %1161 = vmatpush2.bf16.msra.mxu0 %v941
    %1162 = vmatprep.subr.bf16.mxu0 0
    %1163 = vmatpush2.bf16.msra.mxu0 %v940
    %1164 = vmatprep.mubr.bf16.mxu0 %v492
    %1165 = vmatmul.mubr.bf16.gmra.mxu0 %v491
    %v1166 = vpop.f32.mrf.mxu0
    %v1167 = vadd.f32 %v1127, %v1166
    %v1168 = vpop.f32.mrf.mxu0
    %v1169 = vpop.f32.mrf.mxu0
    %v1170 = vpop.f32.mrf.mxu0
    %1171 = vdwg.mxu0
    %1172 = vst [vmem:[#allocation10] sm:$0x3] %v1167
    // Predicated region
    $region38: #{tpu_custom_call.1} parent=1 // pred_check
      _
    $region39: #{tpu_custom_call.1} parent=1 // pred_check_branch
      %1174 = sbr.rel (0) target = $region41
    $region40: #{tpu_custom_call.1} parent=1 // pred_region
      %s1176 = ssub.s32 32, 32
      %1177 = vsyncadd [#allocation4], %s1176
      %s1179 = sshll.u32 [#allocation10], 4
      %s1180 = int_to_ptr.vmem [resolvable:$true] %s1179
      %1182 = dma.vmem_to_hbm [thread:$0]  %s1180, 32, %s5, [#allocation4]
    $region41: #{tpu_custom_call.1} parent=1 // pred_fallthru
      _
    // Predicated region
    $region42: #{tpu_custom_call.1} parent=1 // pred_check
      _
    $region43: #{tpu_custom_call.1} parent=1 // pred_check_branch
      %1184 = sbr.rel (0) target = $region45
    $region44: #{tpu_custom_call.1} parent=1 // pred_region
      %1185 = dma.done [#allocation4], 32
    $region45: #{tpu_custom_call.1} parent=1 // pred_fallthru
      _
    %1186 = vsyncpa [#allocation3], 1
    %1187 = vsyncpa [#allocation6], 1
    %1188 = vsyncpa [#allocation9], 1
    %1189 = vsyncpa [#allocation4], 1

</llo_original>
